<compile_context>
chip_gen: v7x
topology: tpu7x:2x2x1
jax: 0.10.0
libtpu: 0.0.40
codegen_flags: <defaults>
</compile_context>

<pallas_src>
import functools
from typing import NamedTuple, Tuple

import jax
import jax.numpy as jnp
from jax.experimental import pallas as pl
from jax.experimental.pallas import tpu as pltpu

_LANE = 128    # TPU lane width (last dim)
_MXU_M = 256   # MXU tile height on v6e/v7x (multiple of v5e's 128 and of 8/16 sublanes)


def _round_up(v, m):
    return ((v + m - 1) // m) * m


def _layer_names(n_layer):
    return ["bfc_in"] + [f"bfc{i}" for i in range(n_layer - 1)] + ["bfc_out"]


# ----------------------------------------------------------------------------
# Fused Pallas kernel: y = W_L( relu( ... relu(W_1 x + b_1) ... ) ) + b_L
# ----------------------------------------------------------------------------
def _fused_mlp_kernel(x_ref, *refs, num_layers):
    """refs = (w_0, b_0, w_1, b_1, ..., w_{L-1}, b_{L-1}, o_ref).

    Matmul inputs are bf16 with f32 accumulation; bias add + ReLU in f32; the
    hidden activation is cast back to bf16 immediately (halves temp VMEM/vregs).
    Hidden activations never leave the chip.
    """
    o_ref = refs[-1]
    h = x_ref[...].astype(jnp.bfloat16)                   # f32 tile -> bf16 in-kernel
    for li in range(num_layers):
        w = refs[2 * li][...]                             # bf16 (d_in_p, d_out_p)
        b = refs[2 * li + 1][...]                         # f32  (1, d_out_p)
        y = jnp.dot(h, w, preferred_element_type=jnp.float32) + b
        if li + 1 < num_layers:
            h = jnp.maximum(y, 0.0).astype(jnp.bfloat16)  # bf16 hidden activation
        else:
            o_ref[...] = y.astype(o_ref.dtype)


# ----------------------------------------------------------------------------
# One-time parameter preparation (hoisted out of the per-call forward path)
# ----------------------------------------------------------------------------
class BayesLinearLnMeta(NamedTuple):
    input_dim: int
    output_dim: int
    num_layers: int
    dims_p: Tuple[int, ...]   # padded feature dims: (in, hid, ..., out)


def prepare_bayes_linear_ln(params, *, input_dim, n_layer=1):
    """Pad W_mu to 128-lane multiples, cast to bf16, reshape b_mu to (1, d) f32.

    Done ONCE; the forward just streams these straight into the kernel.
    Returns (ops, meta) where ops = (w0, b0, w1, b1, ...).
    """
    names = _layer_names(n_layer)
    Ws = [jnp.asarray(params[n]["W_mu"], jnp.float32) for n in names]
    bs = [jnp.asarray(params[n]["b_mu"], jnp.float32) for n in names]
    dims_p = (_round_up(input_dim, _LANE),) + tuple(
        _round_up(int(w.shape[1]), _LANE) for w in Ws)
    ops = []
    for li, (w, b) in enumerate(zip(Ws, bs)):
        d_in, d_out = int(w.shape[0]), int(w.shape[1])
        d_in_p, d_out_p = dims_p[li], dims_p[li + 1]
        w_p = jnp.pad(w, ((0, d_in_p - d_in), (0, d_out_p - d_out))).astype(jnp.bfloat16)
        b_p = jnp.pad(b.reshape(1, d_out), ((0, 0), (0, d_out_p - d_out)))
        ops += [w_p, b_p]
    meta = BayesLinearLnMeta(int(input_dim), int(Ws[-1].shape[1]), len(Ws), dims_p)
    return tuple(ops), meta


def _resident_spec(shape):
    """Constant-index weight/bias block: stays VMEM-resident, single-buffered."""
    try:
        return pl.BlockSpec(shape, lambda i: (0, 0), pipeline_mode=pl.Buffered(1))
    except TypeError:   # very old jax without pipeline_mode kwarg
        return pl.BlockSpec(shape, lambda i: (0, 0))


def _choose_batch_tile(B, dims_p, weight_bytes):
    """Batch tile: multiple of the MXU height, sized to the VMEM left after weights,
    split so the grid has >=2 steps whenever the batch spans >1 MXU-height tile."""
    # per-row VMEM: double-buffered f32 x tile + f32 out tile + ~one f32 + one bf16 temp
    per_row = 2 * dims_p[0] * 4 + 2 * dims_p[-1] * 4 + 6 * max(dims_p)
    # keep (resident weights + activation tiles) under ~48 MiB so v7x (64 MiB/TC) fits;
    # v5e/v6e (128 MiB) simply get more headroom.
    budget = max((48 << 20) - weight_bytes, 4 << 20)
    cap = min(1024, max(_MXU_M, (budget // per_row) // _MXU_M * _MXU_M))
    B_mxu = _round_up(max(B, 1), _MXU_M)
    TB = min(cap, B_mxu)
    if B_mxu > _MXU_M:
        TB = min(TB, _round_up(pl.cdiv(B_mxu, 2), _MXU_M))   # >=2 grid steps
    return TB


# ----------------------------------------------------------------------------
# Forward: single fused pallas_call
# ----------------------------------------------------------------------------
def bayes_linear_ln_forward(prepared, x, *, meta):
    """Deterministic (eval, sample=False) forward of BayesLinearLn.

    Returns (y, tlqw, tlpw) with tlqw = tlpw = 0, matching the PyTorch module.
    """
    dims_p = meta.dims_p
    num_layers = meta.num_layers

    x = x.reshape(-1, meta.input_dim).astype(jnp.float32)
    B = x.shape[0]

    weight_bytes = sum(dims_p[i] * dims_p[i + 1] * 2 + dims_p[i + 1] * 4
                       for i in range(num_layers))
    TB = _choose_batch_tile(B, dims_p, weight_bytes)
    B_p = _round_up(B, TB)
    grid = (B_p // TB,)

    # Zero-pad only when needed (feature dim to 128 lanes, batch to a tile multiple).
    pad_b, pad_f = B_p - B, dims_p[0] - meta.input_dim
    if pad_b or pad_f:
        x = jnp.pad(x, ((0, pad_b), (0, pad_f)))

    in_specs = [pl.BlockSpec((TB, dims_p[0]), lambda i: (i, 0))]
    for li in range(num_layers):
        in_specs.append(_resident_spec((dims_p[li], dims_p[li + 1])))   # weight
        in_specs.append(_resident_spec((1, dims_p[li + 1])))            # bias
    out_spec = pl.BlockSpec((TB, dims_p[-1]), lambda i: (i, 0))

    # Explicit scoped-VMEM budget: single-buffered weights + double-buffered
    # activation tiles + headroom (default limit is only 16/32 MiB).
    act_bytes = TB * (2 * dims_p[0] * 4 + 2 * dims_p[-1] * 4 + 6 * max(dims_p))
    vmem_limit = int(min(128 << 20, max(16 << 20,
                                        1.5 * (weight_bytes + act_bytes) + (4 << 20))))

    flops = int(2 * B_p * sum(dims_p[i] * dims_p[i + 1] for i in range(num_layers)))
    bytes_accessed = int(B_p * dims_p[0] * 4 + weight_bytes + B_p * dims_p[-1] * 4)

    kernel = functools.partial(_fused_mlp_kernel, num_layers=num_layers)

    y_p = pl.pallas_call(
        kernel,
        out_shape=jax.ShapeDtypeStruct((B_p, dims_p[-1]), jnp.float32),
        grid=grid,
        in_specs=in_specs,
        out_specs=out_spec,
        compiler_params=pltpu.CompilerParams(
            dimension_semantics=("parallel",),        # batch axis -> both TCs on v7x
            vmem_limit_bytes=vmem_limit),
        cost_estimate=pl.CostEstimate(
            flops=flops, transcendentals=0, bytes_accessed=bytes_accessed),
    )(x, *prepared)

    # Strip padding back to the logical shape (cheap XLA slice).
    y = y_p[:B, :meta.output_dim]
    return y, 0.0, 0.0


# ----------------------------------------------------------------------------
# Parameter construction (mirrors the nn.Parameter uniform inits)
# ----------------------------------------------------------------------------
def init_bayes_linear_params(key, n_in, n_out):
    k_wmu, k_wp, k_bmu, k_bp = jax.random.split(key, 4)
    return {
        "W_mu": jax.random.uniform(k_wmu, (n_in, n_out), jnp.float32, -0.01, 0.01),
        "b_mu": jax.random.uniform(k_bmu, (n_out,), jnp.float32, -0.01, 0.01),
        # W_p, b_p only feed the (unimplemented) sampled branch; kept for parity.
        "W_p": jax.random.uniform(k_wp, (n_in, n_out), jnp.float32, -4.0, -3.0),
        "b_p": jax.random.uniform(k_bp, (n_out,), jnp.float32, -4.0, -3.0),
    }


def init_bayes_linear_ln(key, input_dim, output_dim, n_hid, n_layer=1):
    keys = jax.random.split(key, n_layer + 1)
    params = {"bfc_in": init_bayes_linear_params(keys[0], input_dim, n_hid)}
    for i in range(n_layer - 1):
        params[f"bfc{i}"] = init_bayes_linear_params(keys[1 + i], n_hid, n_hid)
    params["bfc_out"] = init_bayes_linear_params(keys[n_layer], n_hid, output_dim)
    return params


# ----------------------------------------------------------------------------
# Pure-JAX references for correctness checks
# ----------------------------------------------------------------------------
def _ref_forward_f32(params, x, *, input_dim, n_layer=1):
    names = _layer_names(n_layer)
    h = x.reshape(-1, input_dim)
    for idx, name in enumerate(names):
        y = h @ params[name]["W_mu"] + params[name]["b_mu"]
        h = jnp.maximum(y, 0.0) if idx + 1 < len(names) else y
    return h


def _ref_forward_bf16(params, x, *, input_dim, n_layer=1):
    # Mirrors the kernel's numerics: bf16 matmul inputs, f32 accumulate/epilogue.
    names = _layer_names(n_layer)
    h = x.reshape(-1, input_dim).astype(jnp.float32)
    for idx, name in enumerate(names):
        W = params[name]["W_mu"].astype(jnp.bfloat16)
        b = params[name]["b_mu"].astype(jnp.float32)
        y = jnp.dot(h.astype(jnp.bfloat16), W, preferred_element_type=jnp.float32) + b
        h = jnp.maximum(y, 0.0) if idx + 1 < len(names) else y
    return h


if __name__ == "__main__":
    key = jax.random.PRNGKey(0)
    k_params, k_x = jax.random.split(key)

    # Small, forward-consistent shapes: batch=8, input_dim=32, n_hid=64, out=8
    input_dim, output_dim, n_hid, n_layer = 32, 8, 64, 2
    batch = 8

    params = init_bayes_linear_ln(k_params, input_dim, output_dim, n_hid, n_layer)
    x = jax.random.normal(k_x, (batch, input_dim), jnp.float32)

    # One-time weight prep (padding + bf16 cast hoisted out of the forward path).
    prepared, meta = prepare_bayes_linear_ln(params, input_dim=input_dim, n_layer=n_layer)

    fwd = jax.jit(bayes_linear_ln_forward, static_argnames=("meta",))
    y, tlqw, tlpw = fwd(prepared, x, meta=meta)
    y = jax.block_until_ready(y)

    y_ref_bf16 = _ref_forward_bf16(params, x, input_dim=input_dim, n_layer=n_layer)
    y_ref_f32 = _ref_forward_f32(params, x, input_dim=input_dim, n_layer=n_layer)

    assert y.shape == (batch, output_dim)
    # Tight match vs. a reference using the same bf16-in / f32-accumulate math.
    assert jnp.allclose(y, y_ref_bf16, atol=1e-4, rtol=1e-4), "mismatch vs bf16 reference"
    # Loose sanity check vs. the pure-f32 reference (bf16 rounding only).
    assert jnp.allclose(y, y_ref_f32, atol=2e-3, rtol=2e-2), "mismatch vs f32 reference"
    assert tlqw == 0.0 and tlpw == 0.0

    print("KERNEL_OK")
</pallas_src>

<mosaic_0001>
module attributes {stable_mosaic.version = 11 : i64} {
  func.func @_fused_mlp_kernel(%arg0: i32, %arg1: memref<256x128xf32, #tpu.memory_space<vmem>>, %arg2: memref<128x128xbf16, #tpu.memory_space<vmem>>, %arg3: memref<1x128xf32, #tpu.memory_space<vmem>>, %arg4: memref<128x128xbf16, #tpu.memory_space<vmem>>, %arg5: memref<1x128xf32, #tpu.memory_space<vmem>>, %arg6: memref<128x128xbf16, #tpu.memory_space<vmem>>, %arg7: memref<1x128xf32, #tpu.memory_space<vmem>>, %arg8: memref<256x128xf32, #tpu.memory_space<vmem>>) attributes {dimension_semantics = [#tpu.dimension_semantics<parallel>], iteration_bounds = array<i64: 1>, scalar_prefetch = 0 : i64, scratch_operands = 0 : i64, tpu.core_type = #tpu.core_type<tc>, window_params = [{transform_indices = @transform_0, window_bounds = array<i64: 256, 128>}, {pipeline_mode = #tpu.pipeline_mode<synchronous>, transform_indices = @transform_1, window_bounds = array<i64: 128, 128>}, {pipeline_mode = #tpu.pipeline_mode<synchronous>, transform_indices = @transform_2, window_bounds = array<i64: 1, 128>}, {pipeline_mode = #tpu.pipeline_mode<synchronous>, transform_indices = @transform_3, window_bounds = array<i64: 128, 128>}, {pipeline_mode = #tpu.pipeline_mode<synchronous>, transform_indices = @transform_4, window_bounds = array<i64: 1, 128>}, {pipeline_mode = #tpu.pipeline_mode<synchronous>, transform_indices = @transform_5, window_bounds = array<i64: 128, 128>}, {pipeline_mode = #tpu.pipeline_mode<synchronous>, transform_indices = @transform_6, window_bounds = array<i64: 1, 128>}, {transform_indices = @transform_7, window_bounds = array<i64: 256, 128>}]} {
    %c0 = arith.constant 0 : index
    %c0_0 = arith.constant 0 : index
    %0 = vector.load %arg1[%c0, %c0_0] : memref<256x128xf32, #tpu.memory_space<vmem>>, vector<256x128xf32>
    %1 = arith.truncf %0 : vector<256x128xf32> to vector<256x128xbf16>
    %c0_1 = arith.constant 0 : index
    %c0_2 = arith.constant 0 : index
    %2 = vector.load %arg2[%c0_1, %c0_2] : memref<128x128xbf16, #tpu.memory_space<vmem>>, vector<128x128xbf16>
    %c0_3 = arith.constant 0 : index
    %c0_4 = arith.constant 0 : index
    %3 = vector.load %arg3[%c0_3, %c0_4] : memref<1x128xf32, #tpu.memory_space<vmem>>, vector<1x128xf32>
    %cst = arith.constant dense<0.000000e+00> : vector<256x128xf32>
    %4 = tpu.matmul %1, %2, %cst {dimension_numbers = #tpu.dot_dimension_numbers<[1], [0], [0], [1], [0, 0, 1, 1], [], []>} : vector<256x128xbf16>, vector<128x128xbf16>, vector<256x128xf32> -> vector<256x128xf32>
    %5 = vector.broadcast %3 : vector<1x128xf32> to vector<256x128xf32>
    %6 = arith.addf %4, %5 : vector<256x128xf32>
    %cst_5 = arith.constant 0.000000e+00 : f32
    %7 = vector.broadcast %cst_5 : f32 to vector<256x128xf32>
    %8 = arith.maximumf %6, %7 : vector<256x128xf32>
    %9 = arith.truncf %8 : vector<256x128xf32> to vector<256x128xbf16>
    %c0_6 = arith.constant 0 : index
    %c0_7 = arith.constant 0 : index
    %10 = vector.load %arg4[%c0_6, %c0_7] : memref<128x128xbf16, #tpu.memory_space<vmem>>, vector<128x128xbf16>
    %c0_8 = arith.constant 0 : index
    %c0_9 = arith.constant 0 : index
    %11 = vector.load %arg5[%c0_8, %c0_9] : memref<1x128xf32, #tpu.memory_space<vmem>>, vector<1x128xf32>
    %cst_10 = arith.constant dense<0.000000e+00> : vector<256x128xf32>
    %12 = tpu.matmul %9, %10, %cst_10 {dimension_numbers = #tpu.dot_dimension_numbers<[1], [0], [0], [1], [0, 0, 1, 1], [], []>} : vector<256x128xbf16>, vector<128x128xbf16>, vector<256x128xf32> -> vector<256x128xf32>
    %13 = vector.broadcast %11 : vector<1x128xf32> to vector<256x128xf32>
    %14 = arith.addf %12, %13 : vector<256x128xf32>
    %cst_11 = arith.constant 0.000000e+00 : f32
    %15 = vector.broadcast %cst_11 : f32 to vector<256x128xf32>
    %16 = arith.maximumf %14, %15 : vector<256x128xf32>
    %17 = arith.truncf %16 : vector<256x128xf32> to vector<256x128xbf16>
    %c0_12 = arith.constant 0 : index
    %c0_13 = arith.constant 0 : index
    %18 = vector.load %arg6[%c0_12, %c0_13] : memref<128x128xbf16, #tpu.memory_space<vmem>>, vector<128x128xbf16>
    %c0_14 = arith.constant 0 : index
    %c0_15 = arith.constant 0 : index
    %19 = vector.load %arg7[%c0_14, %c0_15] : memref<1x128xf32, #tpu.memory_space<vmem>>, vector<1x128xf32>
    %cst_16 = arith.constant dense<0.000000e+00> : vector<256x128xf32>
    %20 = tpu.matmul %17, %18, %cst_16 {dimension_numbers = #tpu.dot_dimension_numbers<[1], [0], [0], [1], [0, 0, 1, 1], [], []>} : vector<256x128xbf16>, vector<128x128xbf16>, vector<256x128xf32> -> vector<256x128xf32>
    %21 = vector.broadcast %19 : vector<1x128xf32> to vector<256x128xf32>
    %22 = arith.addf %20, %21 : vector<256x128xf32>
    %c0_17 = arith.constant 0 : index
    %c0_18 = arith.constant 0 : index
    %23 = vector.load %arg8[%c0_17, %c0_18] : memref<256x128xf32, #tpu.memory_space<vmem>>, vector<256x128xf32>
    tpu.vector_store %arg8[%c0_17, %c0_18], %22 {strides = array<i32>} : memref<256x128xf32, #tpu.memory_space<vmem>>, vector<256x128xf32>,
    return
  }
  func.func @transform_0(%arg0: i32) -> (i32, i32) {
    %c0_i32 = arith.constant 0 : i32
    %c0_i32_0 = arith.constant 0 : i32
    return %arg0, %c0_i32 : i32, i32
  }
  func.func @transform_1(%arg0: i32) -> (i32, i32) {
    %c0_i32 = arith.constant 0 : i32
    %c0_i32_0 = arith.constant 0 : i32
    %c0_i32_1 = arith.constant 0 : i32
    return %c0_i32, %c0_i32_0 : i32, i32
  }
  func.func @transform_2(%arg0: i32) -> (i32, i32) {
    %c0_i32 = arith.constant 0 : i32
    %c0_i32_0 = arith.constant 0 : i32
    %c0_i32_1 = arith.constant 0 : i32
    return %c0_i32, %c0_i32_0 : i32, i32
  }
  func.func @transform_3(%arg0: i32) -> (i32, i32) {
    %c0_i32 = arith.constant 0 : i32
    %c0_i32_0 = arith.constant 0 : i32
    %c0_i32_1 = arith.constant 0 : i32
    return %c0_i32, %c0_i32_0 : i32, i32
  }
  func.func @transform_4(%arg0: i32) -> (i32, i32) {
    %c0_i32 = arith.constant 0 : i32
    %c0_i32_0 = arith.constant 0 : i32
    %c0_i32_1 = arith.constant 0 : i32
    return %c0_i32, %c0_i32_0 : i32, i32
  }
  func.func @transform_5(%arg0: i32) -> (i32, i32) {
    %c0_i32 = arith.constant 0 : i32
    %c0_i32_0 = arith.constant 0 : i32
    %c0_i32_1 = arith.constant 0 : i32
    return %c0_i32, %c0_i32_0 : i32, i32
  }
  func.func @transform_6(%arg0: i32) -> (i32, i32) {
    %c0_i32 = arith.constant 0 : i32
    %c0_i32_0 = arith.constant 0 : i32
    %c0_i32_1 = arith.constant 0 : i32
    return %c0_i32, %c0_i32_0 : i32, i32
  }
  func.func @transform_7(%arg0: i32) -> (i32, i32) {
    %c0_i32 = arith.constant 0 : i32
    %c0_i32_0 = arith.constant 0 : i32
    return %arg0, %c0_i32 : i32, i32
  }
}

</mosaic_0001>

<llo_original>
// kernel: bayes_linear_ln_forward.1
$region0: #{bayes_linear_ln_forward.1}
  #allocation0 [shape = 'u32[]', space=smem, size = 0x4, offset = 0x4, fixed_abs, tag = 'smem constant byte address 0x4 - core index']
  #allocation1 [shape = 'u32[144,128]{1,0:T(1,128)}', space=vmem, size = 0x12000, scoped, tag = 'internal scratch']
  %s0 = inlined_call_operand.vmem [shape: f32[256,128], index: 0, kind: input, shape index: {}]
  %s1 = inlined_call_operand.vmem [shape: bf16[128,128], index: 1, kind: input, shape index: {}]
  %s2 = inlined_call_operand.vmem [shape: f32[1,128], index: 2, kind: input, shape index: {}]
  %s3 = inlined_call_operand.vmem [shape: bf16[128,128], index: 3, kind: input, shape index: {}]
  %s4 = inlined_call_operand.vmem [shape: f32[1,128], index: 4, kind: input, shape index: {}]
  %s5 = inlined_call_operand.vmem [shape: bf16[128,128], index: 5, kind: input, shape index: {}]
  %s6 = inlined_call_operand.vmem [shape: f32[1,128], index: 6, kind: input, shape index: {}]
  %s7 = inlined_call_operand.vmem [shape: f32[256,128], index: 7, kind: output, shape index: {}]
  %s8 = sld [smem:[#allocation0]]
  $region38: #{bayes_linear_ln_forward.1} parent=0
    _
  %s10 = ssub.s32 1, %s8
  %s11 = scalar_select 0, %s10, %s8
  // Predicated region
  $region2: #{bayes_linear_ln_forward.1} parent=0 // pred_check
    _
  $region3: #{bayes_linear_ln_forward.1} parent=0 // pred_check_branch
    %13 = sbr.rel (0) target = $region5
  $region4: #{bayes_linear_ln_forward.1} parent=0 // pred_region
    _
  $region5: #{bayes_linear_ln_forward.1} parent=0 // pred_fallthru
    _
  // Predicated region
  $region6: #{bayes_linear_ln_forward.1} parent=0 // pred_check
    _
  $region7: #{bayes_linear_ln_forward.1} parent=0 // pred_check_branch
    %15 = sbr.rel (0) target = $region9
  $region8: #{bayes_linear_ln_forward.1} parent=0 // pred_region
    _
  $region9: #{bayes_linear_ln_forward.1} parent=0 // pred_fallthru
    _
  // Predicated region
  $region10: #{bayes_linear_ln_forward.1} parent=0 // pred_check
    _
  $region11: #{bayes_linear_ln_forward.1} parent=0 // pred_check_branch
    %17 = sbr.rel (0) target = $region13
  $region12: #{bayes_linear_ln_forward.1} parent=0 // pred_region
    _
  $region13: #{bayes_linear_ln_forward.1} parent=0 // pred_fallthru
    _
  // Predicated region
  $region14: #{bayes_linear_ln_forward.1} parent=0 // pred_check
    _
  $region15: #{bayes_linear_ln_forward.1} parent=0 // pred_check_branch
    %19 = sbr.rel (0) target = $region17
  $region16: #{bayes_linear_ln_forward.1} parent=0 // pred_region
    _
  $region17: #{bayes_linear_ln_forward.1} parent=0 // pred_fallthru
    _
  // Predicated region
  $region18: #{bayes_linear_ln_forward.1} parent=0 // pred_check
    _
  $region19: #{bayes_linear_ln_forward.1} parent=0 // pred_check_branch
    %21 = sbr.rel (0) target = $region21
  $region20: #{bayes_linear_ln_forward.1} parent=0 // pred_region
    _
  $region21: #{bayes_linear_ln_forward.1} parent=0 // pred_fallthru
    _
  // Predicated region
  $region22: #{bayes_linear_ln_forward.1} parent=0 // pred_check
    _
  $region23: #{bayes_linear_ln_forward.1} parent=0 // pred_check_branch
    %23 = sbr.rel (0) target = $region25
  $region24: #{bayes_linear_ln_forward.1} parent=0 // pred_region
    _
  $region25: #{bayes_linear_ln_forward.1} parent=0 // pred_fallthru
    _
  // Predicated region
  $region26: #{bayes_linear_ln_forward.1} parent=0 // pred_check
    _
  $region27: #{bayes_linear_ln_forward.1} parent=0 // pred_check_branch
    %25 = sbr.rel (0) target = $region29
  $region28: #{bayes_linear_ln_forward.1} parent=0 // pred_region
    _
  $region29: #{bayes_linear_ln_forward.1} parent=0 // pred_fallthru
    _
  %v27 = vld [vmem:[%s0] sm:$0xff]
  %v28 = vld [vmem:[%s0 + $0x8] sm:$0xff]
  %v29 = vld [vmem:[%s0 + $0x10] sm:$0xff]
  %v30 = vld [vmem:[%s0 + $0x18] sm:$0xff]
  %v31 = vld [vmem:[%s0 + $0x20] sm:$0xff]
  %v32 = vld [vmem:[%s0 + $0x28] sm:$0xff]
  %v33 = vld [vmem:[%s0 + $0x30] sm:$0xff]
  %v34 = vld [vmem:[%s0 + $0x38] sm:$0xff]
  %v35 = vld [vmem:[%s0 + $0x40] sm:$0xff]
  %v36 = vld [vmem:[%s0 + $0x48] sm:$0xff]
  %v37 = vld [vmem:[%s0 + $0x50] sm:$0xff]
  %v38 = vld [vmem:[%s0 + $0x58] sm:$0xff]
  %v39 = vld [vmem:[%s0 + $0x60] sm:$0xff]
  %v40 = vld [vmem:[%s0 + $0x68] sm:$0xff]
  %v41 = vld [vmem:[%s0 + $0x70] sm:$0xff]
  %v42 = vld [vmem:[%s0 + $0x78] sm:$0xff]
  %v43 = vld [vmem:[%s0 + $0x80] sm:$0xff]
  %v44 = vld [vmem:[%s0 + $0x88] sm:$0xff]
  %v45 = vld [vmem:[%s0 + $0x90] sm:$0xff]
  %v46 = vld [vmem:[%s0 + $0x98] sm:$0xff]
  %v47 = vld [vmem:[%s0 + $0xa0] sm:$0xff]
  %v48 = vld [vmem:[%s0 + $0xa8] sm:$0xff]
  %v49 = vld [vmem:[%s0 + $0xb0] sm:$0xff]
  %v50 = vld [vmem:[%s0 + $0xb8] sm:$0xff]
  %v51 = vld [vmem:[%s0 + $0xc0] sm:$0xff]
  %v52 = vld [vmem:[%s0 + $0xc8] sm:$0xff]
  %v53 = vld [vmem:[%s0 + $0xd0] sm:$0xff]
  %v54 = vld [vmem:[%s0 + $0xd8] sm:$0xff]
  %v55 = vld [vmem:[%s0 + $0xe0] sm:$0xff]
  %v56 = vld [vmem:[%s0 + $0xe8] sm:$0xff]
  %v57 = vld [vmem:[%s0 + $0xf0] sm:$0xff]
  %v58 = vld [vmem:[%s0 + $0xf8] sm:$0xff]
  %v59 = vpack.c.bf16 %v28, %v27
  %v60 = vpack.c.bf16 %v30, %v29
  %v61 = vpack.c.bf16 %v32, %v31
  %v62 = vpack.c.bf16 %v34, %v33
  %v63 = vpack.c.bf16 %v36, %v35
  %v64 = vpack.c.bf16 %v38, %v37
  %v65 = vpack.c.bf16 %v40, %v39
  %v66 = vpack.c.bf16 %v42, %v41
  %v67 = vpack.c.bf16 %v44, %v43
  %v68 = vpack.c.bf16 %v46, %v45
  %v69 = vpack.c.bf16 %v48, %v47
  %v70 = vpack.c.bf16 %v50, %v49
  %v71 = vpack.c.bf16 %v52, %v51
  %v72 = vpack.c.bf16 %v54, %v53
  %v73 = vpack.c.bf16 %v56, %v55
  %v74 = vpack.c.bf16 %v58, %v57
  %v75 = vld [vmem:[%s1] sm:$0xf]
  %v76 = vld [vmem:[%s1 + $0x4] sm:$0xf]
  %v77 = vld [vmem:[%s1 + $0x8] sm:$0xf]
  %v78 = vld [vmem:[%s1 + $0xc] sm:$0xf]
  %v79 = vld [vmem:[%s1 + $0x10] sm:$0xf]
  %v80 = vld [vmem:[%s1 + $0x14] sm:$0xf]
  %v81 = vld [vmem:[%s1 + $0x18] sm:$0xf]
  %v82 = vld [vmem:[%s1 + $0x1c] sm:$0xf]
  %v83 = vld [vmem:[%s1 + $0x20] sm:$0xf]
  %v84 = vld [vmem:[%s1 + $0x24] sm:$0xf]
  %v85 = vld [vmem:[%s1 + $0x28] sm:$0xf]
  %v86 = vld [vmem:[%s1 + $0x2c] sm:$0xf]
  %v87 = vld [vmem:[%s1 + $0x30] sm:$0xf]
  %v88 = vld [vmem:[%s1 + $0x34] sm:$0xf]
  %v89 = vld [vmem:[%s1 + $0x38] sm:$0xf]
  %v90 = vld [vmem:[%s1 + $0x3c] sm:$0xf]
  %v91 = vld [vmem:[%s2] sm:$0x1]
  %v93 = vlaneseq
  %v94 = vshrl.u32 %v93, 7
  %v95 = vsub.s32 0, %v94
  %v96 = vrot.slane %v91, %v95
  %v114 = vunpack.c.l.b16 %v75
  %v115 = vunpack.c.l.b16 %v76
  %v116 = vunpack.c.l.b16 %v77
  %v117 = vunpack.c.l.b16 %v78
  %v118 = vunpack.c.l.b16 %v79
  %v119 = vunpack.c.l.b16 %v80
  %v120 = vunpack.c.l.b16 %v81
  %v121 = vunpack.c.l.b16 %v82
  %v122 = vunpack.c.l.b16 %v83
  %v123 = vunpack.c.l.b16 %v84
  %v124 = vunpack.c.l.b16 %v85
  %v125 = vunpack.c.l.b16 %v86
  %v126 = vunpack.c.l.b16 %v87
  %v127 = vunpack.c.l.b16 %v88
  %v128 = vunpack.c.l.b16 %v89
  %v129 = vunpack.c.l.b16 %v90
  %v130 = vpack.c.b16 %v115, %v114
  %v131 = vpack.c.b16 %v117, %v116
  %v132 = vpack.c.b16 %v119, %v118
  %v133 = vpack.c.b16 %v121, %v120
  %v134 = vpack.c.b16 %v123, %v122
  %v135 = vpack.c.b16 %v125, %v124
  %v136 = vpack.c.b16 %v127, %v126
  %v137 = vpack.c.b16 %v129, %v128
  %146 = vmatprep.subr.bf16.mxu0 0
  %147 = vmatpush1.bf16.msra.mxu0 %v130
  %148 = vmatprep.subr.bf16.mxu0 0
  %149 = vmatpush1.bf16.msra.mxu0 %v131
  %150 = vmatprep.subr.bf16.mxu0 0
  %151 = vmatpush1.bf16.msra.mxu0 %v132
  %152 = vmatprep.subr.bf16.mxu0 0
  %153 = vmatpush1.bf16.msra.mxu0 %v133
  %154 = vmatprep.subr.bf16.mxu0 0
  %155 = vmatpush1.bf16.msra.mxu0 %v134
  %156 = vmatprep.subr.bf16.mxu0 0
  %157 = vmatpush1.bf16.msra.mxu0 %v135
  %158 = vmatprep.subr.bf16.mxu0 0
  %159 = vmatpush1.bf16.msra.mxu0 %v136
  %160 = vmatprep.subr.bf16.mxu0 0
  %161 = vmatpush1.bf16.msra.mxu0 %v137
  %162 = vmatprep.subr.bf16.mxu0 0
  %163 = vmatpush1.bf16.msra.mxu0 0
  %164 = vmatprep.subr.bf16.mxu0 0
  %165 = vmatpush1.bf16.msra.mxu0 0
  %166 = vmatprep.subr.bf16.mxu0 0
  %167 = vmatpush1.bf16.msra.mxu0 0
  %168 = vmatprep.subr.bf16.mxu0 0
  %169 = vmatpush1.bf16.msra.mxu0 0
  %170 = vmatprep.subr.bf16.mxu0 0
  %171 = vmatpush1.bf16.msra.mxu0 0
  %172 = vmatprep.subr.bf16.mxu0 0
  %173 = vmatpush1.bf16.msra.mxu0 0
  %174 = vmatprep.subr.bf16.mxu0 0
  %175 = vmatpush1.bf16.msra.mxu0 0
  %176 = vmatprep.subr.bf16.mxu0 0
  %177 = vmatpush1.bf16.msra.mxu0 0
  %178 = vmatprep.mubr.bf16.mxu0 0
  %179 = vmatmul.mubr.bf16.gmra.mrb[0].mxu0 %v59
  %v180 = vpop.f32.mrb[0].mxu0
  %v181 = vadd.f32 %v96, %v180
  %v182 = vpop.f32.mrb[0].mxu0
  %v183 = vpop.f32.mrb[0].mxu0
  %v184 = vadd.f32 %v96, %v183
  %v185 = vpop.f32.mrb[0].mxu0
  %186 = vmatprep.mubr.bf16.mxu0 0
  %187 = vmatmul.mubr.bf16.gmra.mrb[0].mxu0 %v60
  %v188 = vpop.f32.mrb[0].mxu0
  %v189 = vadd.f32 %v96, %v188
  %v190 = vpop.f32.mrb[0].mxu0
  %v191 = vpop.f32.mrb[0].mxu0
  %v192 = vadd.f32 %v96, %v191
  %v193 = vpop.f32.mrb[0].mxu0
  %194 = vmatprep.mubr.bf16.mxu0 0
  %195 = vmatmul.mubr.bf16.gmra.mrb[0].mxu0 %v61
  %v196 = vpop.f32.mrb[0].mxu0
  %v197 = vadd.f32 %v96, %v196
  %v198 = vpop.f32.mrb[0].mxu0
  %v199 = vpop.f32.mrb[0].mxu0
  %v200 = vadd.f32 %v96, %v199
  %v201 = vpop.f32.mrb[0].mxu0
  %202 = vmatprep.mubr.bf16.mxu0 0
  %203 = vmatmul.mubr.bf16.gmra.mrb[0].mxu0 %v62
  %v204 = vpop.f32.mrb[0].mxu0
  %v205 = vadd.f32 %v96, %v204
  %v206 = vpop.f32.mrb[0].mxu0
  %v207 = vpop.f32.mrb[0].mxu0
  %v208 = vadd.f32 %v96, %v207
  %v209 = vpop.f32.mrb[0].mxu0
  %210 = vmatprep.mubr.bf16.mxu0 0
  %211 = vmatmul.mubr.bf16.gmra.mrb[0].mxu0 %v63
  %v212 = vpop.f32.mrb[0].mxu0
  %v213 = vadd.f32 %v96, %v212
  %v214 = vpop.f32.mrb[0].mxu0
  %v215 = vpop.f32.mrb[0].mxu0
  %v216 = vadd.f32 %v96, %v215
  %v217 = vpop.f32.mrb[0].mxu0
  %218 = vmatprep.mubr.bf16.mxu0 0
  %219 = vmatmul.mubr.bf16.gmra.mrb[0].mxu0 %v64
  %v220 = vpop.f32.mrb[0].mxu0
  %v221 = vadd.f32 %v96, %v220
  %v222 = vpop.f32.mrb[0].mxu0
  %v223 = vpop.f32.mrb[0].mxu0
  %v224 = vadd.f32 %v96, %v223
  %v225 = vpop.f32.mrb[0].mxu0
  %226 = vmatprep.mubr.bf16.mxu0 0
  %227 = vmatmul.mubr.bf16.gmra.mrb[0].mxu0 %v65
  %v228 = vpop.f32.mrb[0].mxu0
  %v229 = vadd.f32 %v96, %v228
  %v230 = vpop.f32.mrb[0].mxu0
  %v231 = vpop.f32.mrb[0].mxu0
  %v232 = vadd.f32 %v96, %v231
  %v233 = vpop.f32.mrb[0].mxu0
  %234 = vmatprep.mubr.bf16.mxu0 0
  %235 = vmatmul.mubr.bf16.gmra.mrb[0].mxu0 %v66
  %v236 = vpop.f32.mrb[0].mxu0
  %v237 = vadd.f32 %v96, %v236
  %v238 = vpop.f32.mrb[0].mxu0
  %v239 = vpop.f32.mrb[0].mxu0
  %v240 = vadd.f32 %v96, %v239
  %v241 = vpop.f32.mrb[0].mxu0
  %242 = vmatprep.mubr.bf16.mxu0 0
  %243 = vmatmul.mubr.bf16.gmra.mrb[0].mxu0 %v67
  %v244 = vpop.f32.mrb[0].mxu0
  %v245 = vadd.f32 %v96, %v244
  %v246 = vpop.f32.mrb[0].mxu0
  %v247 = vpop.f32.mrb[0].mxu0
  %v248 = vadd.f32 %v96, %v247
  %v249 = vpop.f32.mrb[0].mxu0
  %250 = vmatprep.mubr.bf16.mxu0 0
  %251 = vmatmul.mubr.bf16.gmra.mrb[0].mxu0 %v68
  %v252 = vpop.f32.mrb[0].mxu0
  %v253 = vadd.f32 %v96, %v252
  %v254 = vpop.f32.mrb[0].mxu0
  %v255 = vpop.f32.mrb[0].mxu0
  %v256 = vadd.f32 %v96, %v255
  %v257 = vpop.f32.mrb[0].mxu0
  %258 = vmatprep.mubr.bf16.mxu0 0
  %259 = vmatmul.mubr.bf16.gmra.mrb[0].mxu0 %v69
  %v260 = vpop.f32.mrb[0].mxu0
  %v261 = vadd.f32 %v96, %v260
  %v262 = vpop.f32.mrb[0].mxu0
  %v263 = vpop.f32.mrb[0].mxu0
  %v264 = vadd.f32 %v96, %v263
  %v265 = vpop.f32.mrb[0].mxu0
  %266 = vmatprep.mubr.bf16.mxu0 0
  %267 = vmatmul.mubr.bf16.gmra.mrb[0].mxu0 %v70
  %v268 = vpop.f32.mrb[0].mxu0
  %v269 = vadd.f32 %v96, %v268
  %v270 = vpop.f32.mrb[0].mxu0
  %v271 = vpop.f32.mrb[0].mxu0
  %v272 = vadd.f32 %v96, %v271
  %v273 = vpop.f32.mrb[0].mxu0
  %274 = vmatprep.mubr.bf16.mxu0 0
  %275 = vmatmul.mubr.bf16.gmra.mrb[0].mxu0 %v71
  %v276 = vpop.f32.mrb[0].mxu0
  %v277 = vadd.f32 %v96, %v276
  %v278 = vpop.f32.mrb[0].mxu0
  %v279 = vpop.f32.mrb[0].mxu0
  %v280 = vadd.f32 %v96, %v279
  %v281 = vpop.f32.mrb[0].mxu0
  %282 = vmatprep.mubr.bf16.mxu0 0
  %283 = vmatmul.mubr.bf16.gmra.mrb[0].mxu0 %v72
  %v284 = vpop.f32.mrb[0].mxu0
  %v285 = vadd.f32 %v96, %v284
  %v286 = vpop.f32.mrb[0].mxu0
  %v287 = vpop.f32.mrb[0].mxu0
  %v288 = vadd.f32 %v96, %v287
  %v289 = vpop.f32.mrb[0].mxu0
  %290 = vmatprep.mubr.bf16.mxu0 0
  %291 = vmatmul.mubr.bf16.gmra.mrb[0].mxu0 %v73
  %v292 = vpop.f32.mrb[0].mxu0
  %v293 = vadd.f32 %v96, %v292
  %v294 = vpop.f32.mrb[0].mxu0
  %v295 = vpop.f32.mrb[0].mxu0
  %v296 = vadd.f32 %v96, %v295
  %v297 = vpop.f32.mrb[0].mxu0
  %298 = vmatprep.mubr.bf16.mxu0 0
  %299 = vmatmul.mubr.bf16.gmra.mrb[0].mxu0 %v74
  %v300 = vpop.f32.mrb[0].mxu0
  %v301 = vadd.f32 %v96, %v300
  %v302 = vpop.f32.mrb[0].mxu0
  %v303 = vpop.f32.mrb[0].mxu0
  %v304 = vadd.f32 %v96, %v303
  %v305 = vpop.f32.mrb[0].mxu0
  %306 = vdwg.mxu0
  %v307 = vmax.f32 %v181, 0.0
  %v308 = vmax.f32 %v184, 0.0
  %v309 = vmax.f32 %v189, 0.0
  %v310 = vmax.f32 %v192, 0.0
  %v311 = vmax.f32 %v197, 0.0
  %v312 = vmax.f32 %v200, 0.0
  %v313 = vmax.f32 %v205, 0.0
  %v314 = vmax.f32 %v208, 0.0
  %v315 = vmax.f32 %v213, 0.0
  %v316 = vmax.f32 %v216, 0.0
  %v317 = vmax.f32 %v221, 0.0
  %v318 = vmax.f32 %v224, 0.0
  %v319 = vmax.f32 %v229, 0.0
  %v320 = vmax.f32 %v232, 0.0
  %v321 = vmax.f32 %v237, 0.0
  %v322 = vmax.f32 %v240, 0.0
  %v323 = vmax.f32 %v245, 0.0
  %v324 = vmax.f32 %v248, 0.0
  %v325 = vmax.f32 %v253, 0.0
  %v326 = vmax.f32 %v256, 0.0
  %v327 = vmax.f32 %v261, 0.0
  %v328 = vmax.f32 %v264, 0.0
  %v329 = vmax.f32 %v269, 0.0
  %v330 = vmax.f32 %v272, 0.0
  %v331 = vmax.f32 %v277, 0.0
  %v332 = vmax.f32 %v280, 0.0
  %v333 = vmax.f32 %v285, 0.0
  %v334 = vmax.f32 %v288, 0.0
  %v335 = vmax.f32 %v293, 0.0
  %v336 = vmax.f32 %v296, 0.0
  %v337 = vmax.f32 %v301, 0.0
  %v338 = vmax.f32 %v304, 0.0
  %v339 = vpack.c.bf16 %v308, %v307
  %v340 = vpack.c.bf16 %v310, %v309
  %v341 = vpack.c.bf16 %v312, %v311
  %v342 = vpack.c.bf16 %v314, %v313
  %v343 = vpack.c.bf16 %v316, %v315
  %v344 = vpack.c.bf16 %v318, %v317
  %v345 = vpack.c.bf16 %v320, %v319
  %v346 = vpack.c.bf16 %v322, %v321
  %v347 = vpack.c.bf16 %v324, %v323
  %v348 = vpack.c.bf16 %v326, %v325
  %v349 = vpack.c.bf16 %v328, %v327
  %v350 = vpack.c.bf16 %v330, %v329
  %v351 = vpack.c.bf16 %v332, %v331
  %v352 = vpack.c.bf16 %v334, %v333
  %v353 = vpack.c.bf16 %v336, %v335
  %v354 = vpack.c.bf16 %v338, %v337
  %v355 = vld [vmem:[%s3] sm:$0xf]
  %v356 = vld [vmem:[%s3 + $0x4] sm:$0xf]
  %v357 = vld [vmem:[%s3 + $0x8] sm:$0xf]
  %v358 = vld [vmem:[%s3 + $0xc] sm:$0xf]
  %v359 = vld [vmem:[%s3 + $0x10] sm:$0xf]
  %v360 = vld [vmem:[%s3 + $0x14] sm:$0xf]
  %v361 = vld [vmem:[%s3 + $0x18] sm:$0xf]
  %v362 = vld [vmem:[%s3 + $0x1c] sm:$0xf]
  %v363 = vld [vmem:[%s3 + $0x20] sm:$0xf]
  %v364 = vld [vmem:[%s3 + $0x24] sm:$0xf]
  %v365 = vld [vmem:[%s3 + $0x28] sm:$0xf]
  %v366 = vld [vmem:[%s3 + $0x2c] sm:$0xf]
  %v367 = vld [vmem:[%s3 + $0x30] sm:$0xf]
  %v368 = vld [vmem:[%s3 + $0x34] sm:$0xf]
  %v369 = vld [vmem:[%s3 + $0x38] sm:$0xf]
  %v370 = vld [vmem:[%s3 + $0x3c] sm:$0xf]
  %v371 = vld [vmem:[%s4] sm:$0x1]
  %v373 = vlaneseq
  %v374 = vshrl.u32 %v373, 7
  %v375 = vsub.s32 0, %v374
  %v376 = vrot.slane %v371, %v375
  %v394 = vunpack.c.l.b16 %v355
  %v395 = vunpack.c.l.b16 %v356
  %v396 = vunpack.c.l.b16 %v357
  %v397 = vunpack.c.l.b16 %v358
  %v398 = vunpack.c.l.b16 %v359
  %v399 = vunpack.c.l.b16 %v360
  %v400 = vunpack.c.l.b16 %v361
  %v401 = vunpack.c.l.b16 %v362
  %v402 = vunpack.c.l.b16 %v363
  %v403 = vunpack.c.l.b16 %v364
  %v404 = vunpack.c.l.b16 %v365
  %v405 = vunpack.c.l.b16 %v366
  %v406 = vunpack.c.l.b16 %v367
  %v407 = vunpack.c.l.b16 %v368
  %v408 = vunpack.c.l.b16 %v369
  %v409 = vunpack.c.l.b16 %v370
  %v410 = vpack.c.b16 %v395, %v394
  %v411 = vpack.c.b16 %v397, %v396
  %v412 = vpack.c.b16 %v399, %v398
  %v413 = vpack.c.b16 %v401, %v400
  %v414 = vpack.c.b16 %v403, %v402
  %v415 = vpack.c.b16 %v405, %v404
  %v416 = vpack.c.b16 %v407, %v406
  %v417 = vpack.c.b16 %v409, %v408
  %426 = vmatprep.subr.bf16.mxu0 0
  %427 = vmatpush1.bf16.msra.mxu0 %v410
  %428 = vmatprep.subr.bf16.mxu0 0
  %429 = vmatpush1.bf16.msra.mxu0 %v411
  %430 = vmatprep.subr.bf16.mxu0 0
  %431 = vmatpush1.bf16.msra.mxu0 %v412
  %432 = vmatprep.subr.bf16.mxu0 0
  %433 = vmatpush1.bf16.msra.mxu0 %v413
  %434 = vmatprep.subr.bf16.mxu0 0
  %435 = vmatpush1.bf16.msra.mxu0 %v414
  %436 = vmatprep.subr.bf16.mxu0 0
  %437 = vmatpush1.bf16.msra.mxu0 %v415
  %438 = vmatprep.subr.bf16.mxu0 0
  %439 = vmatpush1.bf16.msra.mxu0 %v416
  %440 = vmatprep.subr.bf16.mxu0 0
  %441 = vmatpush1.bf16.msra.mxu0 %v417
  %442 = vmatprep.subr.bf16.mxu0 0
  %443 = vmatpush1.bf16.msra.mxu0 0
  %444 = vmatprep.subr.bf16.mxu0 0
  %445 = vmatpush1.bf16.msra.mxu0 0
  %446 = vmatprep.subr.bf16.mxu0 0
  %447 = vmatpush1.bf16.msra.mxu0 0
  %448 = vmatprep.subr.bf16.mxu0 0
  %449 = vmatpush1.bf16.msra.mxu0 0
  %450 = vmatprep.subr.bf16.mxu0 0
  %451 = vmatpush1.bf16.msra.mxu0 0
  %452 = vmatprep.subr.bf16.mxu0 0
  %453 = vmatpush1.bf16.msra.mxu0 0
  %454 = vmatprep.subr.bf16.mxu0 0
  %455 = vmatpush1.bf16.msra.mxu0 0
  %456 = vmatprep.subr.bf16.mxu0 0
  %457 = vmatpush1.bf16.msra.mxu0 0
  %458 = vmatprep.mubr.bf16.mxu0 0
  %459 = vmatmul.mubr.bf16.gmra.mrb[0].mxu0 %v339
  %v460 = vpop.f32.mrb[0].mxu0
  %v461 = vadd.f32 %v376, %v460
  %v462 = vpop.f32.mrb[0].mxu0
  %v463 = vpop.f32.mrb[0].mxu0
  %v464 = vadd.f32 %v376, %v463
  %v465 = vpop.f32.mrb[0].mxu0
  %466 = vmatprep.mubr.bf16.mxu0 0
  %467 = vmatmul.mubr.bf16.gmra.mrb[0].mxu0 %v340
  %v468 = vpop.f32.mrb[0].mxu0
  %v469 = vadd.f32 %v376, %v468
  %v470 = vpop.f32.mrb[0].mxu0
  %v471 = vpop.f32.mrb[0].mxu0
  %v472 = vadd.f32 %v376, %v471
  %v473 = vpop.f32.mrb[0].mxu0
  %474 = vmatprep.mubr.bf16.mxu0 0
  %475 = vmatmul.mubr.bf16.gmra.mrb[0].mxu0 %v341
  %v476 = vpop.f32.mrb[0].mxu0
  %v477 = vadd.f32 %v376, %v476
  %v478 = vpop.f32.mrb[0].mxu0
  %v479 = vpop.f32.mrb[0].mxu0
  %v480 = vadd.f32 %v376, %v479
  %v481 = vpop.f32.mrb[0].mxu0
  %482 = vmatprep.mubr.bf16.mxu0 0
  %483 = vmatmul.mubr.bf16.gmra.mrb[0].mxu0 %v342
  %v484 = vpop.f32.mrb[0].mxu0
  %v485 = vadd.f32 %v376, %v484
  %v486 = vpop.f32.mrb[0].mxu0
  %v487 = vpop.f32.mrb[0].mxu0
  %v488 = vadd.f32 %v376, %v487
  %v489 = vpop.f32.mrb[0].mxu0
  %490 = vmatprep.mubr.bf16.mxu0 0
  %491 = vmatmul.mubr.bf16.gmra.mrb[0].mxu0 %v343
  %v492 = vpop.f32.mrb[0].mxu0
  %v493 = vadd.f32 %v376, %v492
  %v494 = vpop.f32.mrb[0].mxu0
  %v495 = vpop.f32.mrb[0].mxu0
  %v496 = vadd.f32 %v376, %v495
  %v497 = vpop.f32.mrb[0].mxu0
  %498 = vmatprep.mubr.bf16.mxu0 0
  %499 = vmatmul.mubr.bf16.gmra.mrb[0].mxu0 %v344
  %v500 = vpop.f32.mrb[0].mxu0
  %v501 = vadd.f32 %v376, %v500
  %v502 = vpop.f32.mrb[0].mxu0
  %v503 = vpop.f32.mrb[0].mxu0
  %v504 = vadd.f32 %v376, %v503
  %v505 = vpop.f32.mrb[0].mxu0
  %506 = vmatprep.mubr.bf16.mxu0 0
  %507 = vmatmul.mubr.bf16.gmra.mrb[0].mxu0 %v345
  %v508 = vpop.f32.mrb[0].mxu0
  %v509 = vadd.f32 %v376, %v508
  %v510 = vpop.f32.mrb[0].mxu0
  %v511 = vpop.f32.mrb[0].mxu0
  %v512 = vadd.f32 %v376, %v511
  %v513 = vpop.f32.mrb[0].mxu0
  %514 = vmatprep.mubr.bf16.mxu0 0
  %515 = vmatmul.mubr.bf16.gmra.mrb[0].mxu0 %v346
  %v516 = vpop.f32.mrb[0].mxu0
  %v517 = vadd.f32 %v376, %v516
  %v518 = vpop.f32.mrb[0].mxu0
  %v519 = vpop.f32.mrb[0].mxu0
  %v520 = vadd.f32 %v376, %v519
  %v521 = vpop.f32.mrb[0].mxu0
  %522 = vmatprep.mubr.bf16.mxu0 0
  %523 = vmatmul.mubr.bf16.gmra.mrb[0].mxu0 %v347
  %v524 = vpop.f32.mrb[0].mxu0
  %v525 = vadd.f32 %v376, %v524
  %v526 = vpop.f32.mrb[0].mxu0
  %v527 = vpop.f32.mrb[0].mxu0
  %v528 = vadd.f32 %v376, %v527
  %v529 = vpop.f32.mrb[0].mxu0
  %530 = vmatprep.mubr.bf16.mxu0 0
  %531 = vmatmul.mubr.bf16.gmra.mrb[0].mxu0 %v348
  %v532 = vpop.f32.mrb[0].mxu0
  %v533 = vadd.f32 %v376, %v532
  %v534 = vpop.f32.mrb[0].mxu0
  %v535 = vpop.f32.mrb[0].mxu0
  %v536 = vadd.f32 %v376, %v535
  %v537 = vpop.f32.mrb[0].mxu0
  %538 = vmatprep.mubr.bf16.mxu0 0
  %539 = vmatmul.mubr.bf16.gmra.mrb[0].mxu0 %v349
  %v540 = vpop.f32.mrb[0].mxu0
  %v541 = vadd.f32 %v376, %v540
  %v542 = vpop.f32.mrb[0].mxu0
  %v543 = vpop.f32.mrb[0].mxu0
  %v544 = vadd.f32 %v376, %v543
  %v545 = vpop.f32.mrb[0].mxu0
  %546 = vmatprep.mubr.bf16.mxu0 0
  %547 = vmatmul.mubr.bf16.gmra.mrb[0].mxu0 %v350
  %v548 = vpop.f32.mrb[0].mxu0
  %v549 = vadd.f32 %v376, %v548
  %v550 = vpop.f32.mrb[0].mxu0
  %v551 = vpop.f32.mrb[0].mxu0
  %v552 = vadd.f32 %v376, %v551
  %v553 = vpop.f32.mrb[0].mxu0
  %554 = vmatprep.mubr.bf16.mxu0 0
  %555 = vmatmul.mubr.bf16.gmra.mrb[0].mxu0 %v351
  %v556 = vpop.f32.mrb[0].mxu0
  %v557 = vadd.f32 %v376, %v556
  %v558 = vpop.f32.mrb[0].mxu0
  %v559 = vpop.f32.mrb[0].mxu0
  %v560 = vadd.f32 %v376, %v559
  %v561 = vpop.f32.mrb[0].mxu0
  %562 = vmatprep.mubr.bf16.mxu0 0
  %563 = vmatmul.mubr.bf16.gmra.mrb[0].mxu0 %v352
  %v564 = vpop.f32.mrb[0].mxu0
  %v565 = vadd.f32 %v376, %v564
  %v566 = vpop.f32.mrb[0].mxu0
  %v567 = vpop.f32.mrb[0].mxu0
  %v568 = vadd.f32 %v376, %v567
  %v569 = vpop.f32.mrb[0].mxu0
  %570 = vmatprep.mubr.bf16.mxu0 0
  %571 = vmatmul.mubr.bf16.gmra.mrb[0].mxu0 %v353
  %v572 = vpop.f32.mrb[0].mxu0
  %v573 = vadd.f32 %v376, %v572
  %v574 = vpop.f32.mrb[0].mxu0
  %v575 = vpop.f32.mrb[0].mxu0
  %v576 = vadd.f32 %v376, %v575
  %v577 = vpop.f32.mrb[0].mxu0
  %578 = vmatprep.mubr.bf16.mxu0 0
  %579 = vmatmul.mubr.bf16.gmra.mrb[0].mxu0 %v354
  %v580 = vpop.f32.mrb[0].mxu0
  %v581 = vadd.f32 %v376, %v580
  %v582 = vpop.f32.mrb[0].mxu0
  %v583 = vpop.f32.mrb[0].mxu0
  %v584 = vadd.f32 %v376, %v583
  %v585 = vpop.f32.mrb[0].mxu0
  %586 = vdwg.mxu0
  %v587 = vmax.f32 %v461, 0.0
  %v588 = vmax.f32 %v464, 0.0
  %v589 = vmax.f32 %v469, 0.0
  %v590 = vmax.f32 %v472, 0.0
  %v591 = vmax.f32 %v477, 0.0
  %v592 = vmax.f32 %v480, 0.0
  %v593 = vmax.f32 %v485, 0.0
  %v594 = vmax.f32 %v488, 0.0
  %v595 = vmax.f32 %v493, 0.0
  %v596 = vmax.f32 %v496, 0.0
  %v597 = vmax.f32 %v501, 0.0
  %v598 = vmax.f32 %v504, 0.0
  %v599 = vmax.f32 %v509, 0.0
  %v600 = vmax.f32 %v512, 0.0
  %v601 = vmax.f32 %v517, 0.0
  %v602 = vmax.f32 %v520, 0.0
  %v603 = vmax.f32 %v525, 0.0
  %v604 = vmax.f32 %v528, 0.0
  %v605 = vmax.f32 %v533, 0.0
  %v606 = vmax.f32 %v536, 0.0
  %v607 = vmax.f32 %v541, 0.0
  %v608 = vmax.f32 %v544, 0.0
  %v609 = vmax.f32 %v549, 0.0
  %v610 = vmax.f32 %v552, 0.0
  %v611 = vmax.f32 %v557, 0.0
  %v612 = vmax.f32 %v560, 0.0
  %v613 = vmax.f32 %v565, 0.0
  %v614 = vmax.f32 %v568, 0.0
  %v615 = vmax.f32 %v573, 0.0
  %v616 = vmax.f32 %v576, 0.0
  %v617 = vmax.f32 %v581, 0.0
  %v618 = vmax.f32 %v584, 0.0
  %v619 = vpack.c.bf16 %v588, %v587
  %v620 = vpack.c.bf16 %v590, %v589
  %v621 = vpack.c.bf16 %v592, %v591
  %v622 = vpack.c.bf16 %v594, %v593
  %v623 = vpack.c.bf16 %v596, %v595
  %v624 = vpack.c.bf16 %v598, %v597
  %v625 = vpack.c.bf16 %v600, %v599
  %v626 = vpack.c.bf16 %v602, %v601
  %v627 = vpack.c.bf16 %v604, %v603
  %v628 = vpack.c.bf16 %v606, %v605
  %v629 = vpack.c.bf16 %v608, %v607
  %v630 = vpack.c.bf16 %v610, %v609
  %v631 = vpack.c.bf16 %v612, %v611
  %v632 = vpack.c.bf16 %v614, %v613
  %v633 = vpack.c.bf16 %v616, %v615
  %v634 = vpack.c.bf16 %v618, %v617
  %v635 = vld [vmem:[%s5] sm:$0xf]
  %v636 = vld [vmem:[%s5 + $0x4] sm:$0xf]
  %v637 = vld [vmem:[%s5 + $0x8] sm:$0xf]
  %v638 = vld [vmem:[%s5 + $0xc] sm:$0xf]
  %v639 = vld [vmem:[%s5 + $0x10] sm:$0xf]
  %v640 = vld [vmem:[%s5 + $0x14] sm:$0xf]
  %v641 = vld [vmem:[%s5 + $0x18] sm:$0xf]
  %v642 = vld [vmem:[%s5 + $0x1c] sm:$0xf]
  %v643 = vld [vmem:[%s5 + $0x20] sm:$0xf]
  %v644 = vld [vmem:[%s5 + $0x24] sm:$0xf]
  %v645 = vld [vmem:[%s5 + $0x28] sm:$0xf]
  %v646 = vld [vmem:[%s5 + $0x2c] sm:$0xf]
  %v647 = vld [vmem:[%s5 + $0x30] sm:$0xf]
  %v648 = vld [vmem:[%s5 + $0x34] sm:$0xf]
  %v649 = vld [vmem:[%s5 + $0x38] sm:$0xf]
  %v650 = vld [vmem:[%s5 + $0x3c] sm:$0xf]
  %v651 = vld [vmem:[%s6] sm:$0x1]
  %v653 = vlaneseq
  %v654 = vshrl.u32 %v653, 7
  %v655 = vsub.s32 0, %v654
  %v656 = vrot.slane %v651, %v655
  %v674 = vunpack.c.l.b16 %v635
  %v675 = vunpack.c.l.b16 %v636
  %v676 = vunpack.c.l.b16 %v637
  %v677 = vunpack.c.l.b16 %v638
  %v678 = vunpack.c.l.b16 %v639
  %v679 = vunpack.c.l.b16 %v640
  %v680 = vunpack.c.l.b16 %v641
  %v681 = vunpack.c.l.b16 %v642
  %v682 = vunpack.c.l.b16 %v643
  %v683 = vunpack.c.l.b16 %v644
  %v684 = vunpack.c.l.b16 %v645
  %v685 = vunpack.c.l.b16 %v646
  %v686 = vunpack.c.l.b16 %v647
  %v687 = vunpack.c.l.b16 %v648
  %v688 = vunpack.c.l.b16 %v649
  %v689 = vunpack.c.l.b16 %v650
  %v690 = vpack.c.b16 %v675, %v674
  %v691 = vpack.c.b16 %v677, %v676
  %v692 = vpack.c.b16 %v679, %v678
  %v693 = vpack.c.b16 %v681, %v680
  %v694 = vpack.c.b16 %v683, %v682
  %v695 = vpack.c.b16 %v685, %v684
  %v696 = vpack.c.b16 %v687, %v686
  %v697 = vpack.c.b16 %v689, %v688
  %706 = vmatprep.subr.bf16.mxu0 0
  %707 = vmatpush1.bf16.msra.mxu0 %v690
  %708 = vmatprep.subr.bf16.mxu0 0
  %709 = vmatpush1.bf16.msra.mxu0 %v691
  %710 = vmatprep.subr.bf16.mxu0 0
  %711 = vmatpush1.bf16.msra.mxu0 %v692
  %712 = vmatprep.subr.bf16.mxu0 0
  %713 = vmatpush1.bf16.msra.mxu0 %v693
  %714 = vmatprep.subr.bf16.mxu0 0
  %715 = vmatpush1.bf16.msra.mxu0 %v694
  %716 = vmatprep.subr.bf16.mxu0 0
  %717 = vmatpush1.bf16.msra.mxu0 %v695
  %718 = vmatprep.subr.bf16.mxu0 0
  %719 = vmatpush1.bf16.msra.mxu0 %v696
  %720 = vmatprep.subr.bf16.mxu0 0
  %721 = vmatpush1.bf16.msra.mxu0 %v697
  %722 = vmatprep.subr.bf16.mxu0 0
  %723 = vmatpush1.bf16.msra.mxu0 0
  %724 = vmatprep.subr.bf16.mxu0 0
  %725 = vmatpush1.bf16.msra.mxu0 0
  %726 = vmatprep.subr.bf16.mxu0 0
  %727 = vmatpush1.bf16.msra.mxu0 0
  %728 = vmatprep.subr.bf16.mxu0 0
  %729 = vmatpush1.bf16.msra.mxu0 0
  %730 = vmatprep.subr.bf16.mxu0 0
  %731 = vmatpush1.bf16.msra.mxu0 0
  %732 = vmatprep.subr.bf16.mxu0 0
  %733 = vmatpush1.bf16.msra.mxu0 0
  %734 = vmatprep.subr.bf16.mxu0 0
  %735 = vmatpush1.bf16.msra.mxu0 0
  %736 = vmatprep.subr.bf16.mxu0 0
  %737 = vmatpush1.bf16.msra.mxu0 0
  %738 = vmatprep.mubr.bf16.mxu0 0
  %739 = vmatmul.mubr.bf16.gmra.mrb[0].mxu0 %v619
  %v740 = vpop.f32.mrb[0].mxu0
  %v741 = vadd.f32 %v656, %v740
  %v742 = vpop.f32.mrb[0].mxu0
  %v743 = vpop.f32.mrb[0].mxu0
  %v744 = vadd.f32 %v656, %v743
  %v745 = vpop.f32.mrb[0].mxu0
  %746 = vmatprep.mubr.bf16.mxu0 0
  %747 = vmatmul.mubr.bf16.gmra.mrb[0].mxu0 %v620
  %v748 = vpop.f32.mrb[0].mxu0
  %v749 = vadd.f32 %v656, %v748
  %v750 = vpop.f32.mrb[0].mxu0
  %v751 = vpop.f32.mrb[0].mxu0
  %v752 = vadd.f32 %v656, %v751
  %v753 = vpop.f32.mrb[0].mxu0
  %754 = vmatprep.mubr.bf16.mxu0 0
  %755 = vmatmul.mubr.bf16.gmra.mrb[0].mxu0 %v621
  %v756 = vpop.f32.mrb[0].mxu0
  %v757 = vadd.f32 %v656, %v756
  %v758 = vpop.f32.mrb[0].mxu0
  %v759 = vpop.f32.mrb[0].mxu0
  %v760 = vadd.f32 %v656, %v759
  %v761 = vpop.f32.mrb[0].mxu0
  %762 = vmatprep.mubr.bf16.mxu0 0
  %763 = vmatmul.mubr.bf16.gmra.mrb[0].mxu0 %v622
  %v764 = vpop.f32.mrb[0].mxu0
  %v765 = vadd.f32 %v656, %v764
  %v766 = vpop.f32.mrb[0].mxu0
  %v767 = vpop.f32.mrb[0].mxu0
  %v768 = vadd.f32 %v656, %v767
  %v769 = vpop.f32.mrb[0].mxu0
  %770 = vmatprep.mubr.bf16.mxu0 0
  %771 = vmatmul.mubr.bf16.gmra.mrb[0].mxu0 %v623
  %v772 = vpop.f32.mrb[0].mxu0
  %v773 = vadd.f32 %v656, %v772
  %v774 = vpop.f32.mrb[0].mxu0
  %v775 = vpop.f32.mrb[0].mxu0
  %v776 = vadd.f32 %v656, %v775
  %v777 = vpop.f32.mrb[0].mxu0
  %778 = vmatprep.mubr.bf16.mxu0 0
  %779 = vmatmul.mubr.bf16.gmra.mrb[0].mxu0 %v624
  %v780 = vpop.f32.mrb[0].mxu0
  %v781 = vadd.f32 %v656, %v780
  %v782 = vpop.f32.mrb[0].mxu0
  %v783 = vpop.f32.mrb[0].mxu0
  %v784 = vadd.f32 %v656, %v783
  %v785 = vpop.f32.mrb[0].mxu0
  %786 = vmatprep.mubr.bf16.mxu0 0
  %787 = vmatmul.mubr.bf16.gmra.mrb[0].mxu0 %v625
  %v788 = vpop.f32.mrb[0].mxu0
  %v789 = vadd.f32 %v656, %v788
  %v790 = vpop.f32.mrb[0].mxu0
  %v791 = vpop.f32.mrb[0].mxu0
  %v792 = vadd.f32 %v656, %v791
  %v793 = vpop.f32.mrb[0].mxu0
  %794 = vmatprep.mubr.bf16.mxu0 0
  %795 = vmatmul.mubr.bf16.gmra.mrb[0].mxu0 %v626
  %v796 = vpop.f32.mrb[0].mxu0
  %v797 = vadd.f32 %v656, %v796
  %v798 = vpop.f32.mrb[0].mxu0
  %v799 = vpop.f32.mrb[0].mxu0
  %v800 = vadd.f32 %v656, %v799
  %v801 = vpop.f32.mrb[0].mxu0
  %802 = vmatprep.mubr.bf16.mxu0 0
  %803 = vmatmul.mubr.bf16.gmra.mrb[0].mxu0 %v627
  %v804 = vpop.f32.mrb[0].mxu0
  %v805 = vadd.f32 %v656, %v804
  %v806 = vpop.f32.mrb[0].mxu0
  %v807 = vpop.f32.mrb[0].mxu0
  %v808 = vadd.f32 %v656, %v807
  %v809 = vpop.f32.mrb[0].mxu0
  %810 = vmatprep.mubr.bf16.mxu0 0
  %811 = vmatmul.mubr.bf16.gmra.mrb[0].mxu0 %v628
  %v812 = vpop.f32.mrb[0].mxu0
  %v813 = vadd.f32 %v656, %v812
  %v814 = vpop.f32.mrb[0].mxu0
  %v815 = vpop.f32.mrb[0].mxu0
  %v816 = vadd.f32 %v656, %v815
  %v817 = vpop.f32.mrb[0].mxu0
  %818 = vmatprep.mubr.bf16.mxu0 0
  %819 = vmatmul.mubr.bf16.gmra.mrb[0].mxu0 %v629
  %v820 = vpop.f32.mrb[0].mxu0
  %v821 = vadd.f32 %v656, %v820
  %v822 = vpop.f32.mrb[0].mxu0
  %v823 = vpop.f32.mrb[0].mxu0
  %v824 = vadd.f32 %v656, %v823
  %v825 = vpop.f32.mrb[0].mxu0
  %826 = vmatprep.mubr.bf16.mxu0 0
  %827 = vmatmul.mubr.bf16.gmra.mrb[0].mxu0 %v630
  %v828 = vpop.f32.mrb[0].mxu0
  %v829 = vadd.f32 %v656, %v828
  %v830 = vpop.f32.mrb[0].mxu0
  %v831 = vpop.f32.mrb[0].mxu0
  %v832 = vadd.f32 %v656, %v831
  %v833 = vpop.f32.mrb[0].mxu0
  %834 = vmatprep.mubr.bf16.mxu0 0
  %835 = vmatmul.mubr.bf16.gmra.mrb[0].mxu0 %v631
  %v836 = vpop.f32.mrb[0].mxu0
  %v837 = vadd.f32 %v656, %v836
  %v838 = vpop.f32.mrb[0].mxu0
  %v839 = vpop.f32.mrb[0].mxu0
  %v840 = vadd.f32 %v656, %v839
  %v841 = vpop.f32.mrb[0].mxu0
  %842 = vmatprep.mubr.bf16.mxu0 0
  %843 = vmatmul.mubr.bf16.gmra.mrb[0].mxu0 %v632
  %v844 = vpop.f32.mrb[0].mxu0
  %v845 = vadd.f32 %v656, %v844
  %v846 = vpop.f32.mrb[0].mxu0
  %v847 = vpop.f32.mrb[0].mxu0
  %v848 = vadd.f32 %v656, %v847
  %v849 = vpop.f32.mrb[0].mxu0
  %850 = vmatprep.mubr.bf16.mxu0 0
  %851 = vmatmul.mubr.bf16.gmra.mrb[0].mxu0 %v633
  %v852 = vpop.f32.mrb[0].mxu0
  %v853 = vadd.f32 %v656, %v852
  %v854 = vpop.f32.mrb[0].mxu0
  %v855 = vpop.f32.mrb[0].mxu0
  %v856 = vadd.f32 %v656, %v855
  %v857 = vpop.f32.mrb[0].mxu0
  %858 = vmatprep.mubr.bf16.mxu0 0
  %859 = vmatmul.mubr.bf16.gmra.mrb[0].mxu0 %v634
  %v860 = vpop.f32.mrb[0].mxu0
  %v861 = vadd.f32 %v656, %v860
  %v862 = vpop.f32.mrb[0].mxu0
  %v863 = vpop.f32.mrb[0].mxu0
  %v864 = vadd.f32 %v656, %v863
  %v865 = vpop.f32.mrb[0].mxu0
  %866 = vdwg.mxu0
  %867 = vst [vmem:[%s7] sm:$0xff] %v741
  %868 = vst [vmem:[%s7 + $0x8] sm:$0xff] %v744
  %869 = vst [vmem:[%s7 + $0x10] sm:$0xff] %v749
  %870 = vst [vmem:[%s7 + $0x18] sm:$0xff] %v752
  %871 = vst [vmem:[%s7 + $0x20] sm:$0xff] %v757
  %872 = vst [vmem:[%s7 + $0x28] sm:$0xff] %v760
  %873 = vst [vmem:[%s7 + $0x30] sm:$0xff] %v765
  %874 = vst [vmem:[%s7 + $0x38] sm:$0xff] %v768
  %875 = vst [vmem:[%s7 + $0x40] sm:$0xff] %v773
  %876 = vst [vmem:[%s7 + $0x48] sm:$0xff] %v776
  %877 = vst [vmem:[%s7 + $0x50] sm:$0xff] %v781
  %878 = vst [vmem:[%s7 + $0x58] sm:$0xff] %v784
  %879 = vst [vmem:[%s7 + $0x60] sm:$0xff] %v789
  %880 = vst [vmem:[%s7 + $0x68] sm:$0xff] %v792
  %881 = vst [vmem:[%s7 + $0x70] sm:$0xff] %v797
  %882 = vst [vmem:[%s7 + $0x78] sm:$0xff] %v800
  %883 = vst [vmem:[%s7 + $0x80] sm:$0xff] %v805
  %884 = vst [vmem:[%s7 + $0x88] sm:$0xff] %v808
  %885 = vst [vmem:[%s7 + $0x90] sm:$0xff] %v813
  %886 = vst [vmem:[%s7 + $0x98] sm:$0xff] %v816
  %887 = vst [vmem:[%s7 + $0xa0] sm:$0xff] %v821
  %888 = vst [vmem:[%s7 + $0xa8] sm:$0xff] %v824
  %889 = vst [vmem:[%s7 + $0xb0] sm:$0xff] %v829
  %890 = vst [vmem:[%s7 + $0xb8] sm:$0xff] %v832
  %891 = vst [vmem:[%s7 + $0xc0] sm:$0xff] %v837
  %892 = vst [vmem:[%s7 + $0xc8] sm:$0xff] %v840
  %893 = vst [vmem:[%s7 + $0xd0] sm:$0xff] %v845
  %894 = vst [vmem:[%s7 + $0xd8] sm:$0xff] %v848
  %895 = vst [vmem:[%s7 + $0xe0] sm:$0xff] %v853
  %896 = vst [vmem:[%s7 + $0xe8] sm:$0xff] %v856
  %897 = vst [vmem:[%s7 + $0xf0] sm:$0xff] %v861
  %898 = vst [vmem:[%s7 + $0xf8] sm:$0xff] %v864
  // Predicated region
  $region30: #{bayes_linear_ln_forward.1} parent=0 // pred_check
    _
  $region31: #{bayes_linear_ln_forward.1} parent=0 // pred_check_branch
    %900 = sbr.rel (0) target = $region33
  $region32: #{bayes_linear_ln_forward.1} parent=0 // pred_region
    _
  $region33: #{bayes_linear_ln_forward.1} parent=0 // pred_fallthru
    _
  // Predicated region
  $region34: #{bayes_linear_ln_forward.1} parent=0 // pred_check
    _
  $region35: #{bayes_linear_ln_forward.1} parent=0 // pred_check_branch
    %902 = sbr.rel (0) target = $region37
  $region36: #{bayes_linear_ln_forward.1} parent=0 // pred_region
    _
  $region37: #{bayes_linear_ln_forward.1} parent=0 // pred_fallthru
    _

</llo_original>
